<compile_context>
chip_gen: v5e
topology: v5e:2x2
jax: 0.10.0
libtpu: 0.0.40
codegen_flags: <defaults>
</compile_context>

<pallas_src>
import jax
import jax.numpy as jnp
from jax.experimental import pallas as pl
from jax.experimental.pallas import tpu as pltpu


def _mask_kernel(x_ref, w_ref, pb_ref, o_ref):
    # x_ref:  (C, tm)     -- one batch's feature tile, spatial on lanes
    # w_ref:  (Cout, C)   -- 1x1-conv weight for the feature channels
    # pb_ref: (Cout, 1)   -- per-batch (pose @ W_p^T + bias), broadcast on lanes
    # o_ref:  (Cout, tm)
    z = jnp.dot(w_ref[...], x_ref[...].astype(jnp.float32),
                preferred_element_type=jnp.float32)
    z = z + pb_ref[...]                       # (Cout, 1) broadcast along lanes
    e = jnp.exp(-z)                           # EUP
    sig = pl.reciprocal(1.0 + e, approx=True)  # EUP vrcp: sigmoid(z) = 1/(1+e^-z)
    o_ref[...] = sig.astype(o_ref.dtype)


def _pick_spatial_tile(hw, c, itemsize, target_bytes=1 << 19, max_lanes=16384):
    """Pick the lane-axis tile: ~512 KiB of x per grid step, multiple of 128
    (or the full spatial extent, which is always a legal block dim)."""
    tm = max(128, target_bytes // max(1, c * itemsize))
    tm = min(tm, max_lanes, hw)
    if tm >= hw:
        return hw
    return max(128, (tm // 128) * 128)


def mask_branch_pallas(x, w_x, pose_bias):
    """Fused 1x1-conv + pose/bias add + sigmoid, NCHW-native.

    x:         [B, C, HW]   (channels-first, spatial flattened)
    w_x:       [Cout, C]
    pose_bias: [B, Cout, 1] (already includes the conv bias)
    returns    [B, Cout, HW]
    """
    B, C, HW = x.shape
    Cout = w_x.shape[0]
    tm = _pick_spatial_tile(HW, C, x.dtype.itemsize)
    grid = (B, pl.cdiv(HW, tm))   # partial tail blocks are masked by Pallas

    return pl.pallas_call(
        _mask_kernel,
        out_shape=jax.ShapeDtypeStruct((B, Cout, HW), x.dtype),
        grid_spec=pltpu.PrefetchScalarGridSpec(
            num_scalar_prefetch=0,
            grid=grid,
            in_specs=[
                pl.BlockSpec((None, C, tm), lambda b, j: (b, 0, j)),
                pl.BlockSpec((Cout, C), lambda b, j: (0, 0)),
                pl.BlockSpec((None, Cout, 1), lambda b, j: (b, 0, 0)),
            ],
            out_specs=pl.BlockSpec((None, Cout, tm), lambda b, j: (b, 0, j)),
        ),
        compiler_params=pltpu.CompilerParams(
            dimension_semantics=("parallel", "parallel"),
        ),
    )(x, w_x, pose_bias)


class ExpressionGeneratorPallas:
    """Mirrors ExpressionGenerator: forward(x, pose_vector) = Mask(x, pose_vector)."""

    def __init__(self, in_channels, pose_dim, out_channels, key):
        kx, kp, kb = jax.random.split(key, 3)
        cin = in_channels + pose_dim
        scale = (2.0 / cin) ** 0.5
        # 1x1-conv weight split into the feature part and the pose part
        # (equivalent to a single conv over concat(x, pose_map)).
        self.w_x = jax.random.normal(kx, (out_channels, in_channels), jnp.float32) * scale
        self.w_p = jax.random.normal(kp, (out_channels, pose_dim), jnp.float32) * scale
        self.b = jax.random.normal(kb, (out_channels,), jnp.float32) * 0.01
        self.in_channels = in_channels
        self.pose_dim = pose_dim
        self.out_channels = out_channels

    def __call__(self, x, pose_vector):
        # x:           [B, C, H, W]  (NCHW, like PyTorch)
        # pose_vector: [B, P]
        B, C, H, W = x.shape
        P = pose_vector.shape[1]
        assert C == self.in_channels and P == self.pose_dim

        # Pure reshape (no transpose / no concat): channels-first, spatial flat.
        x_flat = x.reshape(B, C, H * W)

        # Tiny precompute: fold pose contribution + conv bias into a per-batch
        # per-channel bias; avoids materializing [B, C+P, H, W] entirely.
        pose_bias = (pose_vector.astype(jnp.float32) @ self.w_p.T + self.b)  # [B, Cout]
        pose_bias = pose_bias[:, :, None]                                    # [B, Cout, 1]

        mask_flat = mask_branch_pallas(x_flat, self.w_x, pose_bias)  # [B, Cout, HW]
        return mask_flat.reshape(B, self.out_channels, H, W)         # NCHW, pure reshape


if __name__ == "__main__":
    key = jax.random.PRNGKey(0)
    k_x, k_p, k_params = jax.random.split(key, 3)

    B, C, H, W = 2, 4, 16, 16
    P = 6            # pose vector dim
    Cout = C         # per-channel mask, same channel count as x

    x = jax.random.normal(k_x, (B, C, H, W), jnp.float32)
    pose_vector = jax.random.normal(k_p, (B, P), jnp.float32)

    model = ExpressionGeneratorPallas(C, P, Cout, k_params)
    out = model(x, pose_vector)
    out = jax.block_until_ready(out)

    assert out.shape == (B, Cout, H, W)
    assert bool(jnp.all(jnp.isfinite(out)))
    assert bool(jnp.all((out >= 0.0) & (out <= 1.0)))   # sigmoid range

    # Pure-JAX reference (the original concat + 1x1 conv + sigmoid formulation).
    w_full = jnp.concatenate([model.w_x, model.w_p], axis=1)          # [Cout, C+P]
    pose_map = jnp.broadcast_to(pose_vector[:, :, None, None], (B, P, H, W))
    xp = jnp.concatenate([x, pose_map], axis=1)                       # [B, C+P, H, W]
    ref = jax.nn.sigmoid(
        jnp.einsum("oc,bchw->bohw", w_full, xp) + model.b[None, :, None, None])
    max_err = float(jnp.max(jnp.abs(out - ref)))
    assert max_err < 2e-2, f"max |err| = {max_err}"

    print("KERNEL_OK")
</pallas_src>

<mosaic_0001>
module attributes {stable_mosaic.version = 11 : i64} {
  func.func @_mask_kernel(%arg0: i32, %arg1: i32, %arg2: memref<1x4x256xf32, #tpu.memory_space<vmem>>, %arg3: memref<4x4xf32, #tpu.memory_space<vmem>>, %arg4: memref<1x4x1xf32, #tpu.memory_space<vmem>>, %arg5: memref<1x4x256xf32, #tpu.memory_space<vmem>>) attributes {dimension_semantics = [#tpu.dimension_semantics<parallel>, #tpu.dimension_semantics<parallel>], iteration_bounds = array<i64: 2, 1>, scalar_prefetch = 0 : i64, scratch_operands = 0 : i64, tpu.core_type = #tpu.core_type<tc>, window_params = [{transform_indices = @transform_0, window_bounds = array<i64: 1, 4, 256>}, {pipeline_mode = #tpu.pipeline_mode<synchronous>, transform_indices = @transform_1, window_bounds = array<i64: 4, 4>}, {transform_indices = @transform_2, window_bounds = array<i64: 1, 4, 1>}, {transform_indices = @transform_3, window_bounds = array<i64: 1, 4, 256>}]} {
    %c0 = arith.constant 0 : index
    %c0_0 = arith.constant 0 : index
    %0 = vector.load %arg3[%c0, %c0_0] : memref<4x4xf32, #tpu.memory_space<vmem>>, vector<4x4xf32>
    %c0_1 = arith.constant 0 : index
    %c0_2 = arith.constant 0 : index
    %c0_3 = arith.constant 0 : index
    %1 = vector.load %arg2[%c0_1, %c0_2, %c0_3] : memref<1x4x256xf32, #tpu.memory_space<vmem>>, vector<1x4x256xf32>
    %2 = vector.shape_cast %1 : vector<1x4x256xf32> to vector<4x256xf32>
    %cst = arith.constant dense<0.000000e+00> : vector<4x256xf32>
    %3 = tpu.matmul %0, %2, %cst {dimension_numbers = #tpu.dot_dimension_numbers<[1], [0], [0], [1], [0, 0, 1, 1], [], []>} : vector<4x4xf32>, vector<4x256xf32>, vector<4x256xf32> -> vector<4x256xf32>
    %c0_4 = arith.constant 0 : index
    %c0_5 = arith.constant 0 : index
    %c0_6 = arith.constant 0 : index
    %4 = vector.load %arg4[%c0_4, %c0_5, %c0_6] : memref<1x4x1xf32, #tpu.memory_space<vmem>>, vector<1x4x1xf32>
    %5 = vector.shape_cast %4 : vector<1x4x1xf32> to vector<4x1xf32>
    %6 = vector.broadcast %5 : vector<4x1xf32> to vector<4x256xf32>
    %7 = arith.addf %3, %6 : vector<4x256xf32>
    %cst_7 = arith.constant 0.000000e+00 : f32
    %8 = vector.broadcast %cst_7 : f32 to vector<4x256xf32>
    %9 = arith.subf %8, %7 : vector<4x256xf32>
    %10 = math.exp %9 : vector<4x256xf32>
    %cst_8 = arith.constant 1.000000e+00 : f32
    %11 = vector.broadcast %cst_8 : f32 to vector<4x256xf32>
    %12 = arith.addf %11, %10 : vector<4x256xf32>
    %13 = tpu.reciprocal %12 {approx = true} : vector<4x256xf32> -> vector<4x256xf32>
    %c0_9 = arith.constant 0 : index
    %c0_10 = arith.constant 0 : index
    %c0_11 = arith.constant 0 : index
    %14 = vector.load %arg5[%c0_9, %c0_10, %c0_11] : memref<1x4x256xf32, #tpu.memory_space<vmem>>, vector<1x4x256xf32>
    %15 = vector.shape_cast %14 : vector<1x4x256xf32> to vector<4x256xf32>
    %16 = vector.shape_cast %13 : vector<4x256xf32> to vector<1x4x256xf32>
    tpu.vector_store %arg5[%c0_9, %c0_10, %c0_11], %16 {strides = array<i32>} : memref<1x4x256xf32, #tpu.memory_space<vmem>>, vector<1x4x256xf32>,
    return
  }
  func.func @transform_0(%arg0: i32, %arg1: i32) -> (i32, i32, i32) {
    %c0_i32 = arith.constant 0 : i32
    %c0_i32_0 = arith.constant 0 : i32
    return %arg0, %c0_i32, %arg1 : i32, i32, i32
  }
  func.func @transform_1(%arg0: i32, %arg1: i32) -> (i32, i32) {
    %c0_i32 = arith.constant 0 : i32
    %c0_i32_0 = arith.constant 0 : i32
    %c0_i32_1 = arith.constant 0 : i32
    return %c0_i32, %c0_i32_0 : i32, i32
  }
  func.func @transform_2(%arg0: i32, %arg1: i32) -> (i32, i32, i32) {
    %c0_i32 = arith.constant 0 : i32
    %c0_i32_0 = arith.constant 0 : i32
    %c0_i32_1 = arith.constant 0 : i32
    return %arg0, %c0_i32, %c0_i32_0 : i32, i32, i32
  }
  func.func @transform_3(%arg0: i32, %arg1: i32) -> (i32, i32, i32) {
    %c0_i32 = arith.constant 0 : i32
    %c0_i32_0 = arith.constant 0 : i32
    return %arg0, %c0_i32, %arg1 : i32, i32, i32
  }
}

</mosaic_0001>

<llo_original>
// kernel: tpu_custom_call.1
$region0: #{tpu_custom_call.1}
  #allocation0 [shape = 'u32[]', space=smem, size = 0x4, offset = 0x4, fixed_abs, tag = 'smem constant byte address 0x4 - core index']
  #allocation1 [shape = 'u32[72,128]{1,0:T(1,128)}', space=vmem, size = 0x9000, scoped, tag = 'internal scratch']
  %s0 = inlined_call_operand.hbm [shape: f32[2,4,256], index: 0, kind: input, shape index: {}]
  %s1 = inlined_call_operand.vmem [shape: f32[4,4], index: 1, kind: input, shape index: {}]
  %s2 = inlined_call_operand.vmem [shape: f32[2,4,1], index: 2, kind: input, shape index: {}]
  %s3 = inlined_call_operand.hbm [shape: f32[2,4,256], index: 3, kind: output, shape index: {}]
  %s4 = sld [smem:[#allocation0]]
  $region49: #{tpu_custom_call.1} parent=0
    _
  %s6 = ssub.s32 1, %s4
  %s7 = scalar_select 0, %s6, %s4
  $region1: #{tpu_custom_call.1} parent=0
    #allocation2 [shape = 'u8[8192]{0}', space=vmem, size = 0x2000, scoped, tag = 'input window, operand 0']
    #allocation3 [shape = 's32[2]{0}', space=sflag, size = 0x8, scoped, tag = 'scoped memory for tpu_custom_call.1']
    #allocation4 [shape = 's32[2]{0}', space=sflag, size = 0x8, scoped, tag = 'scoped memory for tpu_custom_call.1']
    #allocation5 [shape = 'u8[8192]{0}', space=vmem, size = 0x2000, scoped, tag = 'output window, operand 0']
    %8 = vsyncpa [#allocation3], 0
    %s9 = scalar_lea.sflag [#allocation3], 1
    %10 = vsyncpa %s9, 0
    %11 = vsyncpa [#allocation4], 0
    %s12 = scalar_lea.sflag [#allocation4], 1
    %13 = vsyncpa %s12, 0
    loop: start=0, step=1, limit=4
    $region2: #{tpu_custom_call.1} parent=1 // loop_pre_header
      _
    $region3: #{tpu_custom_call.1} parent=1 // loop_header
      %s15 = sphi 0, %s19
      %p16 = scmp.ge.s32.totalorder %s15, 4
      %s22 = sphi 0, %s34
      %s23 = sphi 0, %s30
      %s24 = sphi 0, %s22
      %s25 = sphi 0, %s23
      %s26 = sphi 0, %s24
      %s27 = sphi 0, %s25
      %s39 = sphi 0, %s41
      %s42 = sphi 0, %s39
      %s43 = sphi 0, %s42
      %s59 = sphi 0, %s43
      %s63 = sphi 0, %s63
      %s65 = sphi 0, %s63
      %s66 = sphi 0, %s65
      %s80 = sphi 0, %s66
      %s86 = sphi 0, %s88
      %s89 = sphi 0, %s86
      %s90 = sphi 0, %s89
      %s106 = sphi 0, %s90
      %s114 = sphi 0, %s116
      %s117 = sphi 0, %s114
      %s118 = sphi 0, %s117
      %s134 = sphi 0, %s118
    $region4: #{tpu_custom_call.1} parent=1 // loop_header_branch
      %18 = sbr.rel (%p16) target = $region8
    $region5: #{tpu_custom_call.1} parent=1 // loop_body
      %s20 = ssub.s32 %s15, 1
      %s21 = ssub.s32 %s15, 2
      %s28 = sadd.s32 1, %s23
      %p29 = scmp.ge.s32.totalorder %s28, 1
      %s30 = scalar_select %p29, 0, %s28
      %s31 = sadd.s32 1, %s22
      %s32 = scalar_select %p29, %s31, %s22
      %p33 = scmp.ge.s32.totalorder %s32, 2
      %s34 = scalar_select %p33, 0, %s32
      %s35 = ssub.s32 %s22, %s34
      %s36 = ssub.s32 %s23, %s30
      %s37 = sor.u32 %s35, %s36
      %p38 = scmp.eq.s32.totalorder %s37, 0
      %s40 = sadd.s32 %s39, 1
      %s41 = scalar_select %p38, %s39, %s40
      %p44 = pneg %p38
      %p45 = scmp.eq.s32.totalorder %s15, 1
      %p46 = por %p44, %p45
      %p47 = scmp.ne.s32.totalorder %s39, %s42
      %p48 = scmp.eq.s32.totalorder %s15, 0
      %p49 = por %p47, %p48
      %p50 = scmp.ne.s32.totalorder %s39, %s42
      %p51 = scmp.eq.s32.totalorder %s20, 1
      %p52 = por %p50, %p51
      %p53 = scmp.ne.s32.totalorder %s42, %s43
      %p54 = scmp.eq.s32.totalorder %s20, 0
      %p55 = por %p53, %p54
      %p56 = scmp.ne.s32.totalorder %s42, %s43
      %p57 = scmp.eq.s32.totalorder %s21, 1
      %p58 = por %p56, %p57
      %p60 = scmp.ne.s32.totalorder %s43, %s59
      %p61 = scmp.eq.s32.totalorder %s21, 0
      %p62 = por %p60, %p61
      %s64 = sadd.s32 %s63, 1
      %p67 = scmp.eq.s32.totalorder %s15, 1
      %p68 = scmp.ne.s32.totalorder %s63, %s65
      %p69 = scmp.eq.s32.totalorder %s15, 0
      %p70 = por %p68, %p69
      %p71 = scmp.ne.s32.totalorder %s63, %s65
      %p72 = scmp.eq.s32.totalorder %s20, 1
      %p73 = por %p71, %p72
      %p74 = scmp.ne.s32.totalorder %s65, %s66
      %p75 = scmp.eq.s32.totalorder %s20, 0
      %p76 = por %p74, %p75
      %p77 = scmp.ne.s32.totalorder %s65, %s66
      %p78 = scmp.eq.s32.totalorder %s21, 1
      %p79 = por %p77, %p78
      %p81 = scmp.ne.s32.totalorder %s66, %s80
      %p82 = scmp.eq.s32.totalorder %s21, 0
      %p83 = por %p81, %p82
      %s84 = ssub.s32 %s22, %s34
      %p85 = scmp.eq.s32.totalorder %s84, 0
      %s87 = sadd.s32 %s86, 1
      %s88 = scalar_select %p85, %s86, %s87
      %p91 = pneg %p85
      %p92 = scmp.eq.s32.totalorder %s15, 1
      %p93 = por %p91, %p92
      %p94 = scmp.ne.s32.totalorder %s86, %s89
      %p95 = scmp.eq.s32.totalorder %s15, 0
      %p96 = por %p94, %p95
      %p97 = scmp.ne.s32.totalorder %s86, %s89
      %p98 = scmp.eq.s32.totalorder %s20, 1
      %p99 = por %p97, %p98
      %p100 = scmp.ne.s32.totalorder %s89, %s90
      %p101 = scmp.eq.s32.totalorder %s20, 0
      %p102 = por %p100, %p101
      %p103 = scmp.ne.s32.totalorder %s89, %s90
      %p104 = scmp.eq.s32.totalorder %s21, 1
      %p105 = por %p103, %p104
      %p107 = scmp.ne.s32.totalorder %s90, %s106
      %p108 = scmp.eq.s32.totalorder %s21, 0
      %p109 = por %p107, %p108
      %s110 = ssub.s32 %s22, %s34
      %s111 = ssub.s32 %s23, %s30
      %s112 = sor.u32 %s110, %s111
      %p113 = scmp.eq.s32.totalorder %s112, 0
      %s115 = sadd.s32 %s114, 1
      %s116 = scalar_select %p113, %s114, %s115
      %p119 = pneg %p113
      %p120 = scmp.eq.s32.totalorder %s15, 1
      %p121 = por %p119, %p120
      %p122 = scmp.ne.s32.totalorder %s114, %s117
      %p123 = scmp.eq.s32.totalorder %s15, 0
      %p124 = por %p122, %p123
      %p125 = scmp.ne.s32.totalorder %s114, %s117
      %p126 = scmp.eq.s32.totalorder %s20, 1
      %p127 = por %p125, %p126
      %p128 = scmp.ne.s32.totalorder %s117, %s118
      %p129 = scmp.eq.s32.totalorder %s20, 0
      %p130 = por %p128, %p129
      %p131 = scmp.ne.s32.totalorder %s117, %s118
      %p132 = scmp.eq.s32.totalorder %s21, 1
      %p133 = por %p131, %p132
      %p135 = scmp.ne.s32.totalorder %s118, %s134
      %p136 = scmp.eq.s32.totalorder %s21, 0
      %p137 = por %p135, %p136
      %p138 = scmp.le.s32.totalorder 1, %s15
      %p139 = scmp.lt.s32.totalorder %s15, 3
      %p140 = pnand %p138, %p139
      %p141 = pneg %p140
      // Predicated region
      $region9: #{tpu_custom_call.1} parent=5 // pred_check
        _
      $region10: #{tpu_custom_call.1} parent=5 // pred_check_branch
        %143 = sbr.rel (%p140) target = $region12
      $region11: #{tpu_custom_call.1} parent=5 // pred_region
        %s144 = ssub.s32 %s15, 1
        // Predicated region
        $region13: #{tpu_custom_call.1} parent=11 // pred_check
          %p145 = pneg %p76
        $region14: #{tpu_custom_call.1} parent=11 // pred_check_branch
          %147 = sbr.rel (%p145) target = $region16
        $region15: #{tpu_custom_call.1} parent=11 // pred_region
          _
        $region16: #{tpu_custom_call.1} parent=11 // pred_fallthru
          _
      $region12: #{tpu_custom_call.1} parent=5 // pred_fallthru
        _
      %p148 = scmp.lt.s32.totalorder %s15, 2
      // Predicated region
      $region17: #{tpu_custom_call.1} parent=5 // pred_check
        %p149 = pneg %p148
      $region18: #{tpu_custom_call.1} parent=5 // pred_check_branch
        %151 = sbr.rel (%p149) target = $region20
      $region19: #{tpu_custom_call.1} parent=5 // pred_region
        // Predicated region
        $region21: #{tpu_custom_call.1} parent=19 // pred_check
          %p152 = pneg %p49
        $region22: #{tpu_custom_call.1} parent=19 // pred_check_branch
          %154 = sbr.rel (%p152) target = $region24
        $region23: #{tpu_custom_call.1} parent=19 // pred_region
          %s155 = sand.u32 %s39, 1
          %s156 = scalar_lea.sflag [#allocation3], %s155
          %s157 = sand.u32 %s39, 1
          %s158 = smul.addr %s157, 8
          %s159 = scalar_lea.vmem [#allocation2], %s158
          %s160 = smul.u32 2, %s23
          %162 = vsyncadd %s156, 0
          %s163 = smul.addr %s22, 2
          %s164 = sadd.s32 %s160, %s163
          %s165 = smul.addr %s164, 4
          %s166 = scalar_lea.hbm %s0, %s165
          %s168 = sshll.u32 %s166, 4
          %s169 = int_to_ptr.hbm [resolvable:$true] %s168
          %s170 = sshll.u32 %s159, 4
          %s171 = int_to_ptr.vmem [resolvable:$true] %s170
          %173 = dma.hbm_to_vmem [thread:$0]  %s169, 128, %s171, %s156
        $region24: #{tpu_custom_call.1} parent=19 // pred_fallthru
          _
        // Predicated region
        $region25: #{tpu_custom_call.1} parent=19 // pred_check
          %p174 = pneg %p96
        $region26: #{tpu_custom_call.1} parent=19 // pred_check_branch
          %176 = sbr.rel (%p174) target = $region28
        $region27: #{tpu_custom_call.1} parent=19 // pred_region
          %p177 = scmp.lt.s32.totalorder %s22, 1
          %s178 = scalar_select %p177, %s22, 1
          %s179 = smul.addr %s178, 4
          %s180 = scalar_lea.vmem %s2, %s179
        $region28: #{tpu_custom_call.1} parent=19 // pred_fallthru
          _
      $region20: #{tpu_custom_call.1} parent=5 // pred_fallthru
        _
      %p181 = scmp.le.s32.totalorder 1, %s15
      %p182 = scmp.lt.s32.totalorder %s15, 3
      %p183 = pnand %p181, %p182
      %p184 = pneg %p183
      // Predicated region
      $region29: #{tpu_custom_call.1} parent=5 // pred_check
        _
      $region30: #{tpu_custom_call.1} parent=5 // pred_check_branch
        %186 = sbr.rel (%p183) target = $region32
      $region31: #{tpu_custom_call.1} parent=5 // pred_region
        %s187 = ssub.s32 %s15, 1
        %s188 = sand.u32 %s42, 1
        %s189 = scalar_lea.sflag [#allocation3], %s188
        %s190 = sand.u32 %s42, 1
        %s191 = smul.addr %s190, 8
        %s192 = scalar_lea.vmem [#allocation2], %s191
        // Predicated region
        $region33: #{tpu_custom_call.1} parent=31 // pred_check
          %p193 = pneg %p55
        $region34: #{tpu_custom_call.1} parent=31 // pred_check_branch
          %195 = sbr.rel (%p193) target = $region36
        $region35: #{tpu_custom_call.1} parent=31 // pred_region
          %197 = dma.done %s189, 128
        $region36: #{tpu_custom_call.1} parent=31 // pred_fallthru
          _
        %s198 = sand.u32 %s42, 1
        %s199 = scalar_lea.sflag [#allocation3], %s198
        %s200 = sand.u32 %s42, 1
        %s201 = smul.addr %s200, 8
        %s202 = scalar_lea.vmem [#allocation2], %s201
        %p203 = pneg %p55
        %p204 = pneg %p52
        %p205 = pneg %p76
        %p206 = pneg %p73
        %p207 = scmp.lt.s32.totalorder %s24, 1
        %s208 = scalar_select %p207, %s24, 1
        %s209 = smul.addr %s208, 4
        %s210 = scalar_lea.vmem %s2, %s209
        %p211 = pneg %p102
        %p212 = pneg %p99
        %p213 = pneg %p130
        %p214 = pneg %p127
        %s215 = sand.u32 %s117, 1
        %s216 = scalar_lea.sflag [#allocation4], %s215
        %s217 = sand.u32 %s117, 1
        %s218 = smul.addr %s217, 8
        %s219 = scalar_lea.vmem [#allocation5], %s218
        %s220 = smul.u32 2, %s25
        %p221 = scmp.lt.s32.totalorder %s24, 1
        %s222 = scalar_select %p221, %s24, 1
        %s223 = smul.addr %s222, 4
        %s224 = scalar_lea.vmem %s2, %s223
        %s225 = smul.u32 2, %s25
        %v226 = vld [vmem:[%s1] sm:$0xf]
        %v227 = vld [vmem:[%s192] sm:$0xff]
        %v228 = vld [vmem:[%s224] sm:$0xf]
        %230 = vset.pattern.permute.xlu0 0
        %231 = vperm.xlu0 %230, %v228
        %v232 = vpop.permute.xlu0 %231
        %235 = vst [vmem:[#allocation1] ss:$2 sm:$0xff] %v227
        %v236 = vld.sshfl [vmem:[#allocation1] sm:$0xff pattern:$0x75316420]
        %v237 = vld.sshfl [vmem:[#allocation1 + $0x8] sm:$0xff pattern:$0x75316420]
        %vm238 = vcmask 31744
        %v240 = vsel %vm238, %v226, 0
        %vm242 = vcmask 1043456
        %v243 = vsel %vm242, %v236, 0
        %v245 = vsel %vm242, %v237, 0
        %247 = vmatpush.msra.mxu0 0.0
        %248 = vmatpush.msra.mxu0 0.0
        %249 = vmatpush.msra.mxu0 0.0
        %250 = vmatpush.msra.mxu0 0.0
        %251 = vmatpush.msra.mxu0 0.0
        %252 = vmatpush.msra.mxu0 0.0
        %253 = vmatpush.msra.mxu0 0.0
        %254 = vmatpush.msra.mxu0 0.0
        %255 = vmatpush.msra.mxu0 0.0
        %256 = vmatpush.msra.mxu0 0.0
        %257 = vmatpush.msra.mxu0 0.0
        %258 = vmatpush.msra.mxu0 0.0
        %259 = vmatpush.msra.mxu0 0.0
        %260 = vmatpush.msra.mxu0 0.0
        %261 = vmatpush.msra.mxu0 0.0
        %262 = vmatpush.msra.mxu0 %v243
        %263 = vmatmul.f32.gmra.mxu0 %v240
        %v264 = vpop.f32.mrf.mxu0
        %v265 = vadd.f32 %v232, %v264
        %266 = vdwg.mxu0
        %267 = vmatpush.msra.mxu0 0.0
        %268 = vmatpush.msra.mxu0 0.0
        %269 = vmatpush.msra.mxu0 0.0
        %270 = vmatpush.msra.mxu0 0.0
        %271 = vmatpush.msra.mxu0 0.0
        %272 = vmatpush.msra.mxu0 0.0
        %273 = vmatpush.msra.mxu0 0.0
        %274 = vmatpush.msra.mxu0 0.0
        %275 = vmatpush.msra.mxu0 0.0
        %276 = vmatpush.msra.mxu0 0.0
        %277 = vmatpush.msra.mxu0 0.0
        %278 = vmatpush.msra.mxu0 0.0
        %279 = vmatpush.msra.mxu0 0.0
        %280 = vmatpush.msra.mxu0 0.0
        %281 = vmatpush.msra.mxu0 0.0
        %282 = vmatpush.msra.mxu0 %v245
        %283 = vmatmul.f32.gmra.mxu0 %v240
        %v284 = vpop.f32.mrf.mxu0
        %v285 = vadd.f32 %v232, %v284
        %286 = vdwg.mxu0
        %v287 = vsub.f32 0.0, %v265
        %v288 = vsub.f32 0.0, %v285
        %v289 = vmul.f32 %v287, 1.442695
        %v290 = vpow.pop %v289
        %v291 = vmul.f32 %v288, 1.442695
        %v292 = vpow.pop %v291
        %v293 = vadd.f32 %v290, 1.0
        %v294 = vadd.f32 %v292, 1.0
        %v295 = vrcp.pop %v293
        %v296 = vrcp.pop %v294
        %v299 = vrot.slane %v296, 4
        %v300 = vsel %vm242, %v295, %v299
        %302 = vst [vmem:[%s219] sm:$0xff] %v300
        %s303 = sand.u32 %s117, 1
        %s304 = scalar_lea.sflag [#allocation4], %s303
        %s305 = sand.u32 %s117, 1
        %s306 = smul.addr %s305, 8
        %s307 = scalar_lea.vmem [#allocation5], %s306
        // Predicated region
        $region37: #{tpu_custom_call.1} parent=31 // pred_check
          %p308 = pneg %p127
        $region38: #{tpu_custom_call.1} parent=31 // pred_check_branch
          %310 = sbr.rel (%p308) target = $region40
        $region39: #{tpu_custom_call.1} parent=31 // pred_region
          %s311 = smul.u32 2, %s25
          %313 = vsyncadd %s304, 0
          %s314 = smul.addr %s24, 2
          %s315 = sadd.s32 %s311, %s314
          %s316 = smul.addr %s315, 4
          %s317 = scalar_lea.hbm %s3, %s316
          %s319 = sshll.u32 %s307, 4
          %s320 = int_to_ptr.vmem [resolvable:$true] %s319
          %s321 = sshll.u32 %s317, 4
          %s322 = int_to_ptr.hbm [resolvable:$true] %s321
          %324 = dma.vmem_to_hbm [thread:$0]  %s320, 128, %s322, %s304
        $region40: #{tpu_custom_call.1} parent=31 // pred_fallthru
          _
      $region32: #{tpu_custom_call.1} parent=5 // pred_fallthru
        _
      %p325 = scmp.le.s32.totalorder 2, %s15
      // Predicated region
      $region41: #{tpu_custom_call.1} parent=5 // pred_check
        %p326 = pneg %p325
      $region42: #{tpu_custom_call.1} parent=5 // pred_check_branch
        %328 = sbr.rel (%p326) target = $region44
      $region43: #{tpu_custom_call.1} parent=5 // pred_region
        %s329 = ssub.s32 %s15, 2
        // Predicated region
        $region45: #{tpu_custom_call.1} parent=43 // pred_check
          %p330 = pneg %p133
        $region46: #{tpu_custom_call.1} parent=43 // pred_check_branch
          %332 = sbr.rel (%p330) target = $region48
        $region47: #{tpu_custom_call.1} parent=43 // pred_region
          %s333 = sand.u32 %s118, 1
          %s334 = scalar_lea.sflag [#allocation4], %s333
          %s335 = sand.u32 %s118, 1
          %s336 = smul.addr %s335, 8
          %s337 = scalar_lea.vmem [#allocation5], %s336
          %339 = dma.done %s334, 128
        $region48: #{tpu_custom_call.1} parent=43 // pred_fallthru
          _
      $region44: #{tpu_custom_call.1} parent=5 // pred_fallthru
        _
    $region6: #{tpu_custom_call.1} parent=1 // loop_footer
      %s19 = sadd.s32 1, %s15
    $region7: #{tpu_custom_call.1} parent=1 // loop_footer_branch
      %14 = sbr.rel target = $region3
    $region8: #{tpu_custom_call.1} parent=1 // loop_exit
      _
    %340 = vsyncpa [#allocation3], 1
    %s341 = scalar_lea.sflag [#allocation3], 1
    %342 = vsyncpa %s341, 1
    %343 = vsyncpa [#allocation4], 1
    %s344 = scalar_lea.sflag [#allocation4], 1
    %345 = vsyncpa %s344, 1

</llo_original>
